<compile_context>
chip_gen: v7x
topology: tpu7x:2x2x1
jax: 0.10.0
libtpu: 0.0.40
codegen_flags: <defaults>
</compile_context>

<pallas_src>
from functools import partial

import jax
import jax.numpy as jnp
from jax.experimental import pallas as pl
from jax.experimental.pallas import tpu as pltpu


def _alias_identity_kernel(x_hbm, o_hbm, flag_smem):
    # The output buffer aliases the input buffer (input_output_aliases={0: 0}),
    # so the data is already in place: nothing to move.  A single SMEM scalar
    # write keeps the body non-empty without touching HBM.
    del x_hbm, o_hbm
    flag_smem[0] = jnp.int32(1)


def _dma_identity_kernel(chunks, x_hbm, o_hbm, sems):
    # Direct HBM->HBM copy in a few large contiguous chunks along axis 0.
    # Chunk bounds are static Python ints, so this fully unrolls; all DMAs are
    # started before any wait so several are in flight concurrently.
    copies = []
    for i, (start, size) in enumerate(chunks):
        cp = pltpu.make_async_copy(
            x_hbm.at[pl.ds(start, size)],
            o_hbm.at[pl.ds(start, size)],
            sems.at[i],
        )
        cp.start()
        copies.append(cp)
    for cp in copies:
        cp.wait()


def identity_pallas(x, *, alias_input=False, max_chunks=8):
    """Identity forward: returns an array equal to `x` (any shape/dtype).

    alias_input=False -> fresh output buffer filled by direct HBM->HBM DMA.
    alias_input=True  -> output aliases the input buffer (zero HBM traffic
                         when the input is donated, e.g. via jax.jit(...,
                         donate_argnums=0)).
    """
    if x.ndim == 0 or x.size == 0:
        # Degenerate shapes: nothing a DMA kernel can improve on.
        return x

    itemsize = jnp.dtype(x.dtype).itemsize
    total_bytes = x.size * itemsize

    if alias_input:
        return pl.pallas_call(
            _alias_identity_kernel,
            out_shape=jax.ShapeDtypeStruct(x.shape, x.dtype),
            in_specs=[pl.BlockSpec(memory_space=pl.ANY)],
            out_specs=pl.BlockSpec(memory_space=pl.ANY),
            scratch_shapes=[pltpu.SMEM((1,), jnp.int32)],
            input_output_aliases={0: 0},
        )(x)

    # Fresh output buffer: chunk along the leading axis so large arrays keep
    # several (up to `max_chunks`) contiguous >=1 MiB DMAs in flight; small
    # arrays use a single DMA (less issue overhead).
    lead = x.shape[0]
    n_chunks = int(max(1, min(max_chunks, lead, -(-total_bytes // (1 << 20)))))
    base, rem = divmod(lead, n_chunks)
    chunks, start = [], 0
    for i in range(n_chunks):
        size = base + (1 if i < rem else 0)
        chunks.append((start, size))
        start += size

    return pl.pallas_call(
        partial(_dma_identity_kernel, tuple(chunks)),
        out_shape=jax.ShapeDtypeStruct(x.shape, x.dtype),
        in_specs=[pl.BlockSpec(memory_space=pl.ANY)],
        out_specs=pl.BlockSpec(memory_space=pl.ANY),
        scratch_shapes=[pltpu.SemaphoreType.DMA((n_chunks,))],
        compiler_params=pltpu.CompilerParams(
            # No VMEM-staged blocks at all, so a modest scoped-VMEM cap is
            # plenty and safe on v7x's 64 MiB as well as v5e/v6e's 128 MiB.
            vmem_limit_bytes=32 * 1024 * 1024,
        ),
        cost_estimate=pl.CostEstimate(
            flops=0,
            transcendentals=0,
            bytes_accessed=2 * total_bytes,
        ),
    )(x)


if __name__ == "__main__":
    key = jax.random.PRNGKey(0)
    # Small NCHW input consistent with how Identity is used in the model.
    x = jax.random.normal(key, (2, 4, 16, 16), dtype=jnp.float32)

    # Path 1 (default): distinct output buffer via direct HBM->HBM DMA.
    out = jax.block_until_ready(identity_pallas(x))
    assert out.shape == x.shape
    assert out.dtype == x.dtype
    assert bool(jnp.array_equal(out, x))

    # Path 2: zero-copy Identity — donate the input so the output aliases it.
    identity_aliased = jax.jit(
        partial(identity_pallas, alias_input=True), donate_argnums=0
    )
    x_donatable = x + 0.0  # separate buffer; x itself stays valid for the check
    out2 = jax.block_until_ready(identity_aliased(x_donatable))
    assert out2.shape == x.shape
    assert out2.dtype == x.dtype
    assert bool(jnp.array_equal(out2, x))

    print("KERNEL_OK")
</pallas_src>

<mosaic_0001>
module attributes {stable_mosaic.version = 11 : i64} {
  func.func @_dma_identity_kernel(%arg0: memref<2x4x16x16xf32, #tpu.memory_space<any>>, %arg1: memref<2x4x16x16xf32, #tpu.memory_space<any>>, %arg2: memref<1x!tpu.dma_semaphore, #tpu.memory_space<semaphore_mem>>) attributes {dimension_semantics = [], scalar_prefetch = 0 : i64, scratch_operands = 1 : i64, tpu.core_type = #tpu.core_type<tc>} {
    %c0_i32 = arith.constant 0 : i32
    %c0_i32_0 = arith.constant 0 : i32
    %c0_i32_1 = arith.constant 0 : i32
    %c0_i32_2 = arith.constant 0 : i32
    %c0_i32_3 = arith.constant 0 : i32
    %0 = tpu.memref_slice %arg0[%c0_i32_0, %c0_i32_1, %c0_i32_2, %c0_i32_3] : memref<2x4x16x16xf32, #tpu.memory_space<any>> -> memref<2x4x16x16xf32, #tpu.memory_space<any>>
    %c0_i32_4 = arith.constant 0 : i32
    %c0_i32_5 = arith.constant 0 : i32
    %c0_i32_6 = arith.constant 0 : i32
    %c0_i32_7 = arith.constant 0 : i32
    %1 = tpu.memref_slice %arg1[%c0_i32_4, %c0_i32_5, %c0_i32_6, %c0_i32_7] : memref<2x4x16x16xf32, #tpu.memory_space<any>> -> memref<2x4x16x16xf32, #tpu.memory_space<any>>
    %2 = tpu.memref_slice %arg2[%c0_i32] : memref<1x!tpu.dma_semaphore, #tpu.memory_space<semaphore_mem>> -> memref<1x!tpu.dma_semaphore, #tpu.memory_space<semaphore_mem>>
    %3 = tpu.memref_squeeze %2 : memref<1x!tpu.dma_semaphore, #tpu.memory_space<semaphore_mem>> -> memref<!tpu.dma_semaphore, #tpu.memory_space<semaphore_mem>>
    tpu.enqueue_dma source(%0 : memref<2x4x16x16xf32, #tpu.memory_space<any>>) target(%1 : memref<2x4x16x16xf32, #tpu.memory_space<any>>) target_semaphore(%3 : memref<!tpu.dma_semaphore, #tpu.memory_space<semaphore_mem>>)
    %c0_i32_8 = arith.constant 0 : i32
    %c0_i32_9 = arith.constant 0 : i32
    %c0_i32_10 = arith.constant 0 : i32
    %c0_i32_11 = arith.constant 0 : i32
    %c0_i32_12 = arith.constant 0 : i32
    %4 = tpu.memref_slice %arg0[%c0_i32_9, %c0_i32_10, %c0_i32_11, %c0_i32_12] : memref<2x4x16x16xf32, #tpu.memory_space<any>> -> memref<2x4x16x16xf32, #tpu.memory_space<any>>
    %c0_i32_13 = arith.constant 0 : i32
    %c0_i32_14 = arith.constant 0 : i32
    %c0_i32_15 = arith.constant 0 : i32
    %c0_i32_16 = arith.constant 0 : i32
    %5 = tpu.memref_slice %arg1[%c0_i32_13, %c0_i32_14, %c0_i32_15, %c0_i32_16] : memref<2x4x16x16xf32, #tpu.memory_space<any>> -> memref<2x4x16x16xf32, #tpu.memory_space<any>>
    %6 = tpu.memref_slice %arg2[%c0_i32_8] : memref<1x!tpu.dma_semaphore, #tpu.memory_space<semaphore_mem>> -> memref<1x!tpu.dma_semaphore, #tpu.memory_space<semaphore_mem>>
    %7 = tpu.memref_squeeze %6 : memref<1x!tpu.dma_semaphore, #tpu.memory_space<semaphore_mem>> -> memref<!tpu.dma_semaphore, #tpu.memory_space<semaphore_mem>>
    tpu.wait_dma2 semaphore(%7 : memref<!tpu.dma_semaphore, #tpu.memory_space<semaphore_mem>>) src(%4 : memref<2x4x16x16xf32, #tpu.memory_space<any>>) dst(%5 : memref<2x4x16x16xf32, #tpu.memory_space<any>>)
    return
  }
}

</mosaic_0001>

<llo_original>
// kernel: tpu_custom_call.1
$region0: #{tpu_custom_call.1}
  #allocation0 [shape = 'u32[]', space=smem, size = 0x4, offset = 0x4, fixed_abs, tag = 'smem constant byte address 0x4 - core index']
  #allocation1 [shape = 'u32[144,128]{1,0:T(1,128)}', space=vmem, size = 0x12000, scoped, tag = 'internal scratch']
  #allocation2 [shape = 's32[1]{0}', space=sflag, size = 0x4, scoped, tag = 'scratch operand']
  #allocation3 [shape = 's32[]', space=sflag, size = 0x4, offset = 0, fixed_abs, tag = 'sflag constant byte address 0x0 - dummy sync flag']
  #allocation4 [shape = 'u32[0]{0}', space=smem, size = 0, offset = 0, fixed_abs, tag = 'smem constant byte address 0x0 - null']
  %s0 = inlined_call_operand.hbm [shape: f32[2,4,16,16], index: 0, kind: input, shape index: {}]
  %s1 = inlined_call_operand.hbm [shape: f32[2,4,16,16], index: 1, kind: output, shape index: {}]
  %s2 = sld [smem:[#allocation0]]
  $region2: #{tpu_custom_call.1} parent=0
    _
  %s4 = ssub.s32 1, %s2
  %s5 = scalar_select 0, %s4, %s2
  %s7 = sshll.u32 1, 14
  %s8 = sxor.u32 4294967295, %s7
  %s11 = sshll.u32 3, 24
  %s12 = sxor.u32 4294967295, %s11
  %s13 = sand.u32 0, %s12
  %s15 = sor.u32 %s13, 0
  %18 = dma.general %s0, 2048, %s1, [#allocation2], [#allocation3], [#allocation4], %s15, 0
  %s19 = smul.u32 2, 4
  %s20 = smul.u32 %s19, 16
  %s21 = smul.u32 %s20, 1
  %s22 = sshll.u32 %s21, 4
  %23 = dma.done [#allocation2], %s22
  %24 = vsyncmov [#allocation2]
  %s25 = vpop.sfrf %24
  %p26 = scmp.eq.s32.totalorder %s25, 0
  %p27 = pneg %p26
  %29 = shalt.err (%p27)

</llo_original>
